<compile_context>
chip_gen: v7x
topology: tpu7x:2x2x1
jax: 0.10.0
libtpu: 0.0.40
codegen_flags: <defaults>
</compile_context>

<pallas_src>
import jax
import jax.numpy as jnp
from jax.experimental import pallas as pl
from jax.experimental.pallas import tpu as pltpu

# ----------------------- model / problem sizes -----------------------
VOCAB_SIZE = 50
EMBED_DIM = 32       # config.embedding_dim
HIDDEN = 32          # config.hidden_size
NUM_CLASSES = 2
BATCH = 2
SEQ_LEN = 8
OUT_PAD = 128        # lane-dense logits slab; sliced to NUM_CLASSES in wrapper


# ----------------------------- kernel --------------------------------
def _bilstm_classifier_kernel(
    ids_ref,      # (T*B, 1)  int32, VMEM — token ids, row layout t*B + b
    xw_tab_ref,   # (V, 8H)   f32,   VMEM — emb @ [W_ih_f^T | W_ih_b^T] + biases,
                  #                         g-gate columns pre-scaled by 2
    whh_f_ref,    # (H, 4H)   bf16,  VMEM — forward W_hh^T, g-gate cols pre-scaled by 2
    wc_f_ref,     # (H, 128)  bf16  — classifier weight^T, forward half, zero-padded
    wc_b_ref,     # (H, 128)  bf16  — classifier weight^T, backward half, zero-padded
    bc_ref,       # (1, 128)  f32   — classifier bias, zero-padded
    out_ref,      # (B, 128)  f32   — padded logits (cols >= NUM_CLASSES are 0)
):
    B = out_ref.shape[0]
    TB = ids_ref.shape[0]
    T = TB // B
    V = xw_tab_ref.shape[0]
    H = whh_f_ref.shape[0]

    whh_f = whh_f_ref[...]            # (H, 4H) bf16
    bc = bc_ref[...]                  # (1, 128) f32

    # ---- fused embedding lookup + input projection + bias fold, as one
    #      one-hot MXU matmul (no scalar gathers, no sublane concats). -------
    ids = ids_ref[...]                                              # (T*B, 1)
    vocab_iota = jax.lax.broadcasted_iota(jnp.int32, (TB, V), 1)    # (T*B, V)
    onehot = (vocab_iota == ids).astype(jnp.float32)                # VPU compare
    xw_all = jnp.dot(onehot, xw_tab_ref[...],
                     preferred_element_type=jnp.float32)            # (T*B, 8H)

    def lstm_cell(gates, c_prev):
        # Single sigmoid EUP push over the whole 4H gate vreg; the g gate is
        # recovered as tanh(z) = 2*sigmoid(2z) - 1 (g columns were pre-scaled
        # by 2 at prep time), so no per-step tanh(gates) push.
        sig = jax.nn.sigmoid(gates)
        i = sig[:, 0 * H:1 * H]
        f = sig[:, 1 * H:2 * H]
        g = 2.0 * sig[:, 2 * H:3 * H] - 1.0
        o = sig[:, 3 * H:4 * H]
        c_new = i * g if c_prev is None else f * c_prev + i * g
        h_new = o * jnp.tanh(c_new)
        return h_new, c_new

    # ---- backward direction + its classifier half, hoisted ahead of the
    #      serial forward recurrence.  PyTorch lstm_out[:, -1, H:] is the
    #      reverse LSTM's FIRST step from a zero state, so the h@W_hh_b matmul
    #      and the f*c term are exactly zero and omitted. --------------------
    xw_bwd = xw_all[(T - 1) * B: T * B, 4 * H:]                     # (B, 4H)
    h_bwd, _ = lstm_cell(xw_bwd, None)
    logits_bwd = (
        jnp.dot(h_bwd.astype(jnp.bfloat16), wc_b_ref[...],
                preferred_element_type=jnp.float32)
        + bc
    )                                                               # (B, 128)

    # ---- forward recurrence, fully unrolled (T static).
    #      Biases are already folded into xw_all; t=0 skips h@W_hh (h0 = 0). --
    h, c = lstm_cell(xw_all[0:B, : 4 * H], None)
    for t in range(1, T):
        gates = xw_all[t * B:(t + 1) * B, : 4 * H] + jnp.dot(
            h.astype(jnp.bfloat16), whh_f, preferred_element_type=jnp.float32)
        h, c = lstm_cell(gates, c)

    # ---- dropout = identity (eval mode); classifier = forward half + hoisted
    #      backward half (no concat, no XLU). --------------------------------
    out_ref[...] = (
        jnp.dot(h.astype(jnp.bfloat16), wc_f_ref[...],
                preferred_element_type=jnp.float32)
        + logits_bwd
    )


# --------------------------- parameters -------------------------------
def init_raw_params(key):
    """Deterministic synthetic parameters, PyTorch-shaped (i,f,g,o gate order)."""
    ks = jax.random.split(key, 10)
    bound = 1.0 / jnp.sqrt(HIDDEN)

    def u(k, shape):
        return jax.random.uniform(k, shape, jnp.float32, -bound, bound)

    return {
        "embedding": jax.random.normal(ks[0], (VOCAB_SIZE, EMBED_DIM), jnp.float32),
        # forward direction (PyTorch l0)
        "w_ih_f": u(ks[1], (4 * HIDDEN, EMBED_DIM)),
        "w_hh_f": u(ks[2], (4 * HIDDEN, HIDDEN)),
        "b_ih_f": u(ks[3], (4 * HIDDEN,)),
        "b_hh_f": u(ks[4], (4 * HIDDEN,)),
        # backward direction (PyTorch l0_reverse)
        "w_ih_b": u(ks[5], (4 * HIDDEN, EMBED_DIM)),
        "w_hh_b": u(ks[6], (4 * HIDDEN, HIDDEN)),
        "b_ih_b": u(ks[7], (4 * HIDDEN,)),
        "b_hh_b": u(ks[8], (4 * HIDDEN,)),
        # classifier
        "w_cls": u(ks[9], (NUM_CLASSES, 2 * HIDDEN)),
        "b_cls": jnp.zeros((NUM_CLASSES,), jnp.float32),
    }


def prepare_params(raw):
    """One-time weight preparation (runs at init, NOT per forward call):
       * fold embedding @ [W_ih_f^T | W_ih_b^T]  AND  (b_ih + b_hh) of both
         directions into a dense 2-D (V, 8H) table,
       * pre-scale the g-gate columns (of the table and of W_hh) by 2 so the
         kernel can use tanh(z) = 2*sigmoid(2z) - 1,
       * pre-transpose / split / bf16-cast MXU operands, zero-pad the
         classifier to 128 output lanes.
    """
    H = HIDDEN
    b_f = raw["b_ih_f"] + raw["b_hh_f"]                          # (4H,)
    b_b = raw["b_ih_b"] + raw["b_hh_b"]                          # (4H,)
    tab = jnp.concatenate(
        [raw["embedding"] @ raw["w_ih_f"].T + b_f[None, :],
         raw["embedding"] @ raw["w_ih_b"].T + b_b[None, :]],
        axis=1,
    )                                                            # (V, 8H)

    # pre-scale g-gate columns by 2 (forward block 2H:3H, backward 6H:7H)
    gscale8 = jnp.ones((8 * H,), jnp.float32)
    gscale8 = gscale8.at[2 * H:3 * H].set(2.0)
    gscale8 = gscale8.at[6 * H:7 * H].set(2.0)
    tab = tab * gscale8[None, :]

    gscale4 = jnp.ones((4 * H,), jnp.float32).at[2 * H:3 * H].set(2.0)
    whh_f = (raw["w_hh_f"].T * gscale4[None, :]).astype(jnp.bfloat16)   # (H, 4H)

    wc = jnp.zeros((2 * H, OUT_PAD), jnp.float32)
    wc = wc.at[:, :NUM_CLASSES].set(raw["w_cls"].T)                     # (2H, 128)
    bc = jnp.zeros((1, OUT_PAD), jnp.float32)
    bc = bc.at[:, :NUM_CLASSES].set(raw["b_cls"])                       # (1, 128)

    return {
        "xw_tab": tab.astype(jnp.float32),            # (V, 8H) f32
        "whh_f": whh_f,                               # (H, 4H) bf16
        "wc_f": wc[:H, :].astype(jnp.bfloat16),       # (H, 128) bf16
        "wc_b": wc[H:, :].astype(jnp.bfloat16),       # (H, 128) bf16
        "bc": bc,                                     # (1, 128) f32
    }


# ----------------------------- wrapper --------------------------------
@jax.jit
def lstm_model_forward(input_ids, attention_mask, prep):
    # attention_mask is accepted but unused, matching the PyTorch forward().
    del attention_mask
    # Row layout t*B + b so each time-step's rows are a static sublane slice.
    ids = input_ids.astype(jnp.int32).T.reshape(SEQ_LEN * BATCH, 1)

    vmem = pl.BlockSpec(memory_space=pltpu.MemorySpace.VMEM)

    padded = pl.pallas_call(
        _bilstm_classifier_kernel,
        out_shape=jax.ShapeDtypeStruct((BATCH, OUT_PAD), jnp.float32),
        in_specs=[vmem, vmem, vmem, vmem, vmem, vmem],
        out_specs=vmem,
    )(ids, prep["xw_tab"], prep["whh_f"], prep["wc_f"], prep["wc_b"], prep["bc"])

    return padded[:, :NUM_CLASSES]                    # (B, 2) logits


if __name__ == "__main__":
    key = jax.random.PRNGKey(0)
    k_params, k_ids = jax.random.split(key)

    raw_params = init_raw_params(k_params)
    prep = prepare_params(raw_params)   # one-time weight folding / casting

    input_ids = jax.random.randint(
        k_ids, (BATCH, SEQ_LEN), minval=0, maxval=VOCAB_SIZE, dtype=jnp.int32
    )
    attention_mask = jnp.ones((BATCH, SEQ_LEN), dtype=jnp.int32)

    logits = lstm_model_forward(input_ids, attention_mask, prep)
    jax.block_until_ready(logits)
    assert logits.shape == (BATCH, NUM_CLASSES)
    print("KERNEL_OK")
</pallas_src>

<mosaic_0001>
module attributes {stable_mosaic.version = 11 : i64} {
  func.func @_bilstm_classifier_kernel(%arg0: memref<16x1xi32, #tpu.memory_space<vmem>>, %arg1: memref<50x256xf32, #tpu.memory_space<vmem>>, %arg2: memref<32x128xbf16, #tpu.memory_space<vmem>>, %arg3: memref<32x128xbf16, #tpu.memory_space<vmem>>, %arg4: memref<32x128xbf16, #tpu.memory_space<vmem>>, %arg5: memref<1x128xf32, #tpu.memory_space<vmem>>, %arg6: memref<2x128xf32, #tpu.memory_space<vmem>>) attributes {dimension_semantics = [], scalar_prefetch = 0 : i64, scratch_operands = 0 : i64, tpu.core_type = #tpu.core_type<tc>} {
    %c0 = arith.constant 0 : index
    %c0_0 = arith.constant 0 : index
    %0 = vector.load %arg2[%c0, %c0_0] : memref<32x128xbf16, #tpu.memory_space<vmem>>, vector<32x128xbf16>
    %c0_1 = arith.constant 0 : index
    %c0_2 = arith.constant 0 : index
    %1 = vector.load %arg5[%c0_1, %c0_2] : memref<1x128xf32, #tpu.memory_space<vmem>>, vector<1x128xf32>
    %c0_3 = arith.constant 0 : index
    %c0_4 = arith.constant 0 : index
    %2 = vector.load %arg0[%c0_3, %c0_4] : memref<16x1xi32, #tpu.memory_space<vmem>>, vector<16x1xi32>
    %3 = tpu.iota {dimensions = array<i32: 1>} : vector<16x50xi32>
    %4 = vector.broadcast %2 : vector<16x1xi32> to vector<16x50xi32>
    %5 = arith.cmpi eq, %3, %4 : vector<16x50xi32>
    %6 = arith.extui %5 : vector<16x50xi1> to vector<16x50xi32>
    %7 = arith.sitofp %6 : vector<16x50xi32> to vector<16x50xf32>
    %c0_5 = arith.constant 0 : index
    %c0_6 = arith.constant 0 : index
    %8 = vector.load %arg1[%c0_5, %c0_6] : memref<50x256xf32, #tpu.memory_space<vmem>>, vector<50x256xf32>
    %cst = arith.constant dense<0.000000e+00> : vector<16x256xf32>
    %9 = tpu.matmul %7, %8, %cst {dimension_numbers = #tpu.dot_dimension_numbers<[1], [0], [0], [1], [0, 0, 1, 1], [], []>} : vector<16x50xf32>, vector<50x256xf32>, vector<16x256xf32> -> vector<16x256xf32>
    %10 = vector.extract_strided_slice %9 {offsets = [14, 128], sizes = [2, 128], strides = [1, 1]} : vector<16x256xf32> to vector<2x128xf32>
    %11 = arith.negf %10 : vector<2x128xf32>
    %12 = math.exp %11 : vector<2x128xf32>
    %cst_7 = arith.constant 1.000000e+00 : f32
    %13 = vector.broadcast %cst_7 : f32 to vector<2x128xf32>
    %14 = arith.addf %13, %12 : vector<2x128xf32>
    %15 = arith.divf %13, %14 : vector<2x128xf32>
    %16 = vector.extract_strided_slice %15 {offsets = [0, 0], sizes = [2, 32], strides = [1, 1]} : vector<2x128xf32> to vector<2x32xf32>
    %17 = vector.extract_strided_slice %15 {offsets = [0, 64], sizes = [2, 32], strides = [1, 1]} : vector<2x128xf32> to vector<2x32xf32>
    %cst_8 = arith.constant 2.000000e+00 : f32
    %18 = vector.broadcast %cst_8 : f32 to vector<2x32xf32>
    %19 = arith.mulf %18, %17 : vector<2x32xf32>
    %cst_9 = arith.constant 1.000000e+00 : f32
    %20 = vector.broadcast %cst_9 : f32 to vector<2x32xf32>
    %21 = arith.subf %19, %20 : vector<2x32xf32>
    %22 = vector.extract_strided_slice %15 {offsets = [0, 96], sizes = [2, 32], strides = [1, 1]} : vector<2x128xf32> to vector<2x32xf32>
    %23 = arith.mulf %16, %21 : vector<2x32xf32>
    %24 = math.tanh %23 : vector<2x32xf32>
    %25 = arith.mulf %22, %24 : vector<2x32xf32>
    %26 = arith.truncf %25 : vector<2x32xf32> to vector<2x32xbf16>
    %c0_10 = arith.constant 0 : index
    %c0_11 = arith.constant 0 : index
    %27 = vector.load %arg4[%c0_10, %c0_11] : memref<32x128xbf16, #tpu.memory_space<vmem>>, vector<32x128xbf16>
    %cst_12 = arith.constant dense<0.000000e+00> : vector<2x128xf32>
    %28 = tpu.matmul %26, %27, %cst_12 {dimension_numbers = #tpu.dot_dimension_numbers<[1], [0], [0], [1], [0, 0, 1, 1], [], []>} : vector<2x32xbf16>, vector<32x128xbf16>, vector<2x128xf32> -> vector<2x128xf32>
    %29 = vector.broadcast %1 : vector<1x128xf32> to vector<2x128xf32>
    %30 = arith.addf %28, %29 : vector<2x128xf32>
    %31 = vector.extract_strided_slice %9 {offsets = [0, 0], sizes = [2, 128], strides = [1, 1]} : vector<16x256xf32> to vector<2x128xf32>
    %32 = arith.negf %31 : vector<2x128xf32>
    %33 = math.exp %32 : vector<2x128xf32>
    %cst_13 = arith.constant 1.000000e+00 : f32
    %34 = vector.broadcast %cst_13 : f32 to vector<2x128xf32>
    %35 = arith.addf %34, %33 : vector<2x128xf32>
    %36 = arith.divf %34, %35 : vector<2x128xf32>
    %37 = vector.extract_strided_slice %36 {offsets = [0, 0], sizes = [2, 32], strides = [1, 1]} : vector<2x128xf32> to vector<2x32xf32>
    %38 = vector.extract_strided_slice %36 {offsets = [0, 64], sizes = [2, 32], strides = [1, 1]} : vector<2x128xf32> to vector<2x32xf32>
    %cst_14 = arith.constant 2.000000e+00 : f32
    %39 = vector.broadcast %cst_14 : f32 to vector<2x32xf32>
    %40 = arith.mulf %39, %38 : vector<2x32xf32>
    %cst_15 = arith.constant 1.000000e+00 : f32
    %41 = vector.broadcast %cst_15 : f32 to vector<2x32xf32>
    %42 = arith.subf %40, %41 : vector<2x32xf32>
    %43 = vector.extract_strided_slice %36 {offsets = [0, 96], sizes = [2, 32], strides = [1, 1]} : vector<2x128xf32> to vector<2x32xf32>
    %44 = arith.mulf %37, %42 : vector<2x32xf32>
    %45 = math.tanh %44 : vector<2x32xf32>
    %46 = arith.mulf %43, %45 : vector<2x32xf32>
    %47 = vector.extract_strided_slice %9 {offsets = [2, 0], sizes = [2, 128], strides = [1, 1]} : vector<16x256xf32> to vector<2x128xf32>
    %48 = arith.truncf %46 : vector<2x32xf32> to vector<2x32xbf16>
    %cst_16 = arith.constant dense<0.000000e+00> : vector<2x128xf32>
    %49 = tpu.matmul %48, %0, %cst_16 {dimension_numbers = #tpu.dot_dimension_numbers<[1], [0], [0], [1], [0, 0, 1, 1], [], []>} : vector<2x32xbf16>, vector<32x128xbf16>, vector<2x128xf32> -> vector<2x128xf32>
    %50 = arith.addf %47, %49 : vector<2x128xf32>
    %51 = arith.negf %50 : vector<2x128xf32>
    %52 = math.exp %51 : vector<2x128xf32>
    %cst_17 = arith.constant 1.000000e+00 : f32
    %53 = vector.broadcast %cst_17 : f32 to vector<2x128xf32>
    %54 = arith.addf %53, %52 : vector<2x128xf32>
    %55 = arith.divf %53, %54 : vector<2x128xf32>
    %56 = vector.extract_strided_slice %55 {offsets = [0, 0], sizes = [2, 32], strides = [1, 1]} : vector<2x128xf32> to vector<2x32xf32>
    %57 = vector.extract_strided_slice %55 {offsets = [0, 32], sizes = [2, 32], strides = [1, 1]} : vector<2x128xf32> to vector<2x32xf32>
    %58 = vector.extract_strided_slice %55 {offsets = [0, 64], sizes = [2, 32], strides = [1, 1]} : vector<2x128xf32> to vector<2x32xf32>
    %cst_18 = arith.constant 2.000000e+00 : f32
    %59 = vector.broadcast %cst_18 : f32 to vector<2x32xf32>
    %60 = arith.mulf %59, %58 : vector<2x32xf32>
    %cst_19 = arith.constant 1.000000e+00 : f32
    %61 = vector.broadcast %cst_19 : f32 to vector<2x32xf32>
    %62 = arith.subf %60, %61 : vector<2x32xf32>
    %63 = vector.extract_strided_slice %55 {offsets = [0, 96], sizes = [2, 32], strides = [1, 1]} : vector<2x128xf32> to vector<2x32xf32>
    %64 = arith.mulf %57, %44 : vector<2x32xf32>
    %65 = arith.mulf %56, %62 : vector<2x32xf32>
    %66 = arith.addf %64, %65 : vector<2x32xf32>
    %67 = math.tanh %66 : vector<2x32xf32>
    %68 = arith.mulf %63, %67 : vector<2x32xf32>
    %69 = vector.extract_strided_slice %9 {offsets = [4, 0], sizes = [2, 128], strides = [1, 1]} : vector<16x256xf32> to vector<2x128xf32>
    %70 = arith.truncf %68 : vector<2x32xf32> to vector<2x32xbf16>
    %cst_20 = arith.constant dense<0.000000e+00> : vector<2x128xf32>
    %71 = tpu.matmul %70, %0, %cst_20 {dimension_numbers = #tpu.dot_dimension_numbers<[1], [0], [0], [1], [0, 0, 1, 1], [], []>} : vector<2x32xbf16>, vector<32x128xbf16>, vector<2x128xf32> -> vector<2x128xf32>
    %72 = arith.addf %69, %71 : vector<2x128xf32>
    %73 = arith.negf %72 : vector<2x128xf32>
    %74 = math.exp %73 : vector<2x128xf32>
    %cst_21 = arith.constant 1.000000e+00 : f32
    %75 = vector.broadcast %cst_21 : f32 to vector<2x128xf32>
    %76 = arith.addf %75, %74 : vector<2x128xf32>
    %77 = arith.divf %75, %76 : vector<2x128xf32>
    %78 = vector.extract_strided_slice %77 {offsets = [0, 0], sizes = [2, 32], strides = [1, 1]} : vector<2x128xf32> to vector<2x32xf32>
    %79 = vector.extract_strided_slice %77 {offsets = [0, 32], sizes = [2, 32], strides = [1, 1]} : vector<2x128xf32> to vector<2x32xf32>
    %80 = vector.extract_strided_slice %77 {offsets = [0, 64], sizes = [2, 32], strides = [1, 1]} : vector<2x128xf32> to vector<2x32xf32>
    %cst_22 = arith.constant 2.000000e+00 : f32
    %81 = vector.broadcast %cst_22 : f32 to vector<2x32xf32>
    %82 = arith.mulf %81, %80 : vector<2x32xf32>
    %cst_23 = arith.constant 1.000000e+00 : f32
    %83 = vector.broadcast %cst_23 : f32 to vector<2x32xf32>
    %84 = arith.subf %82, %83 : vector<2x32xf32>
    %85 = vector.extract_strided_slice %77 {offsets = [0, 96], sizes = [2, 32], strides = [1, 1]} : vector<2x128xf32> to vector<2x32xf32>
    %86 = arith.mulf %79, %66 : vector<2x32xf32>
    %87 = arith.mulf %78, %84 : vector<2x32xf32>
    %88 = arith.addf %86, %87 : vector<2x32xf32>
    %89 = math.tanh %88 : vector<2x32xf32>
    %90 = arith.mulf %85, %89 : vector<2x32xf32>
    %91 = vector.extract_strided_slice %9 {offsets = [6, 0], sizes = [2, 128], strides = [1, 1]} : vector<16x256xf32> to vector<2x128xf32>
    %92 = arith.truncf %90 : vector<2x32xf32> to vector<2x32xbf16>
    %cst_24 = arith.constant dense<0.000000e+00> : vector<2x128xf32>
    %93 = tpu.matmul %92, %0, %cst_24 {dimension_numbers = #tpu.dot_dimension_numbers<[1], [0], [0], [1], [0, 0, 1, 1], [], []>} : vector<2x32xbf16>, vector<32x128xbf16>, vector<2x128xf32> -> vector<2x128xf32>
    %94 = arith.addf %91, %93 : vector<2x128xf32>
    %95 = arith.negf %94 : vector<2x128xf32>
    %96 = math.exp %95 : vector<2x128xf32>
    %cst_25 = arith.constant 1.000000e+00 : f32
    %97 = vector.broadcast %cst_25 : f32 to vector<2x128xf32>
    %98 = arith.addf %97, %96 : vector<2x128xf32>
    %99 = arith.divf %97, %98 : vector<2x128xf32>
    %100 = vector.extract_strided_slice %99 {offsets = [0, 0], sizes = [2, 32], strides = [1, 1]} : vector<2x128xf32> to vector<2x32xf32>
    %101 = vector.extract_strided_slice %99 {offsets = [0, 32], sizes = [2, 32], strides = [1, 1]} : vector<2x128xf32> to vector<2x32xf32>
    %102 = vector.extract_strided_slice %99 {offsets = [0, 64], sizes = [2, 32], strides = [1, 1]} : vector<2x128xf32> to vector<2x32xf32>
    %cst_26 = arith.constant 2.000000e+00 : f32
    %103 = vector.broadcast %cst_26 : f32 to vector<2x32xf32>
    %104 = arith.mulf %103, %102 : vector<2x32xf32>
    %cst_27 = arith.constant 1.000000e+00 : f32
    %105 = vector.broadcast %cst_27 : f32 to vector<2x32xf32>
    %106 = arith.subf %104, %105 : vector<2x32xf32>
    %107 = vector.extract_strided_slice %99 {offsets = [0, 96], sizes = [2, 32], strides = [1, 1]} : vector<2x128xf32> to vector<2x32xf32>
    %108 = arith.mulf %101, %88 : vector<2x32xf32>
    %109 = arith.mulf %100, %106 : vector<2x32xf32>
    %110 = arith.addf %108, %109 : vector<2x32xf32>
    %111 = math.tanh %110 : vector<2x32xf32>
    %112 = arith.mulf %107, %111 : vector<2x32xf32>
    %113 = vector.extract_strided_slice %9 {offsets = [8, 0], sizes = [2, 128], strides = [1, 1]} : vector<16x256xf32> to vector<2x128xf32>
    %114 = arith.truncf %112 : vector<2x32xf32> to vector<2x32xbf16>
    %cst_28 = arith.constant dense<0.000000e+00> : vector<2x128xf32>
    %115 = tpu.matmul %114, %0, %cst_28 {dimension_numbers = #tpu.dot_dimension_numbers<[1], [0], [0], [1], [0, 0, 1, 1], [], []>} : vector<2x32xbf16>, vector<32x128xbf16>, vector<2x128xf32> -> vector<2x128xf32>
    %116 = arith.addf %113, %115 : vector<2x128xf32>
    %117 = arith.negf %116 : vector<2x128xf32>
    %118 = math.exp %117 : vector<2x128xf32>
    %cst_29 = arith.constant 1.000000e+00 : f32
    %119 = vector.broadcast %cst_29 : f32 to vector<2x128xf32>
    %120 = arith.addf %119, %118 : vector<2x128xf32>
    %121 = arith.divf %119, %120 : vector<2x128xf32>
    %122 = vector.extract_strided_slice %121 {offsets = [0, 0], sizes = [2, 32], strides = [1, 1]} : vector<2x128xf32> to vector<2x32xf32>
    %123 = vector.extract_strided_slice %121 {offsets = [0, 32], sizes = [2, 32], strides = [1, 1]} : vector<2x128xf32> to vector<2x32xf32>
    %124 = vector.extract_strided_slice %121 {offsets = [0, 64], sizes = [2, 32], strides = [1, 1]} : vector<2x128xf32> to vector<2x32xf32>
    %cst_30 = arith.constant 2.000000e+00 : f32
    %125 = vector.broadcast %cst_30 : f32 to vector<2x32xf32>
    %126 = arith.mulf %125, %124 : vector<2x32xf32>
    %cst_31 = arith.constant 1.000000e+00 : f32
    %127 = vector.broadcast %cst_31 : f32 to vector<2x32xf32>
    %128 = arith.subf %126, %127 : vector<2x32xf32>
    %129 = vector.extract_strided_slice %121 {offsets = [0, 96], sizes = [2, 32], strides = [1, 1]} : vector<2x128xf32> to vector<2x32xf32>
    %130 = arith.mulf %123, %110 : vector<2x32xf32>
    %131 = arith.mulf %122, %128 : vector<2x32xf32>
    %132 = arith.addf %130, %131 : vector<2x32xf32>
    %133 = math.tanh %132 : vector<2x32xf32>
    %134 = arith.mulf %129, %133 : vector<2x32xf32>
    %135 = vector.extract_strided_slice %9 {offsets = [10, 0], sizes = [2, 128], strides = [1, 1]} : vector<16x256xf32> to vector<2x128xf32>
    %136 = arith.truncf %134 : vector<2x32xf32> to vector<2x32xbf16>
    %cst_32 = arith.constant dense<0.000000e+00> : vector<2x128xf32>
    %137 = tpu.matmul %136, %0, %cst_32 {dimension_numbers = #tpu.dot_dimension_numbers<[1], [0], [0], [1], [0, 0, 1, 1], [], []>} : vector<2x32xbf16>, vector<32x128xbf16>, vector<2x128xf32> -> vector<2x128xf32>
    %138 = arith.addf %135, %137 : vector<2x128xf32>
    %139 = arith.negf %138 : vector<2x128xf32>
    %140 = math.exp %139 : vector<2x128xf32>
    %cst_33 = arith.constant 1.000000e+00 : f32
    %141 = vector.broadcast %cst_33 : f32 to vector<2x128xf32>
    %142 = arith.addf %141, %140 : vector<2x128xf32>
    %143 = arith.divf %141, %142 : vector<2x128xf32>
    %144 = vector.extract_strided_slice %143 {offsets = [0, 0], sizes = [2, 32], strides = [1, 1]} : vector<2x128xf32> to vector<2x32xf32>
    %145 = vector.extract_strided_slice %143 {offsets = [0, 32], sizes = [2, 32], strides = [1, 1]} : vector<2x128xf32> to vector<2x32xf32>
    %146 = vector.extract_strided_slice %143 {offsets = [0, 64], sizes = [2, 32], strides = [1, 1]} : vector<2x128xf32> to vector<2x32xf32>
    %cst_34 = arith.constant 2.000000e+00 : f32
    %147 = vector.broadcast %cst_34 : f32 to vector<2x32xf32>
    %148 = arith.mulf %147, %146 : vector<2x32xf32>
    %cst_35 = arith.constant 1.000000e+00 : f32
    %149 = vector.broadcast %cst_35 : f32 to vector<2x32xf32>
    %150 = arith.subf %148, %149 : vector<2x32xf32>
    %151 = vector.extract_strided_slice %143 {offsets = [0, 96], sizes = [2, 32], strides = [1, 1]} : vector<2x128xf32> to vector<2x32xf32>
    %152 = arith.mulf %145, %132 : vector<2x32xf32>
    %153 = arith.mulf %144, %150 : vector<2x32xf32>
    %154 = arith.addf %152, %153 : vector<2x32xf32>
    %155 = math.tanh %154 : vector<2x32xf32>
    %156 = arith.mulf %151, %155 : vector<2x32xf32>
    %157 = vector.extract_strided_slice %9 {offsets = [12, 0], sizes = [2, 128], strides = [1, 1]} : vector<16x256xf32> to vector<2x128xf32>
    %158 = arith.truncf %156 : vector<2x32xf32> to vector<2x32xbf16>
    %cst_36 = arith.constant dense<0.000000e+00> : vector<2x128xf32>
    %159 = tpu.matmul %158, %0, %cst_36 {dimension_numbers = #tpu.dot_dimension_numbers<[1], [0], [0], [1], [0, 0, 1, 1], [], []>} : vector<2x32xbf16>, vector<32x128xbf16>, vector<2x128xf32> -> vector<2x128xf32>
    %160 = arith.addf %157, %159 : vector<2x128xf32>
    %161 = arith.negf %160 : vector<2x128xf32>
    %162 = math.exp %161 : vector<2x128xf32>
    %cst_37 = arith.constant 1.000000e+00 : f32
    %163 = vector.broadcast %cst_37 : f32 to vector<2x128xf32>
    %164 = arith.addf %163, %162 : vector<2x128xf32>
    %165 = arith.divf %163, %164 : vector<2x128xf32>
    %166 = vector.extract_strided_slice %165 {offsets = [0, 0], sizes = [2, 32], strides = [1, 1]} : vector<2x128xf32> to vector<2x32xf32>
    %167 = vector.extract_strided_slice %165 {offsets = [0, 32], sizes = [2, 32], strides = [1, 1]} : vector<2x128xf32> to vector<2x32xf32>
    %168 = vector.extract_strided_slice %165 {offsets = [0, 64], sizes = [2, 32], strides = [1, 1]} : vector<2x128xf32> to vector<2x32xf32>
    %cst_38 = arith.constant 2.000000e+00 : f32
    %169 = vector.broadcast %cst_38 : f32 to vector<2x32xf32>
    %170 = arith.mulf %169, %168 : vector<2x32xf32>
    %cst_39 = arith.constant 1.000000e+00 : f32
    %171 = vector.broadcast %cst_39 : f32 to vector<2x32xf32>
    %172 = arith.subf %170, %171 : vector<2x32xf32>
    %173 = vector.extract_strided_slice %165 {offsets = [0, 96], sizes = [2, 32], strides = [1, 1]} : vector<2x128xf32> to vector<2x32xf32>
    %174 = arith.mulf %167, %154 : vector<2x32xf32>
    %175 = arith.mulf %166, %172 : vector<2x32xf32>
    %176 = arith.addf %174, %175 : vector<2x32xf32>
    %177 = math.tanh %176 : vector<2x32xf32>
    %178 = arith.mulf %173, %177 : vector<2x32xf32>
    %179 = vector.extract_strided_slice %9 {offsets = [14, 0], sizes = [2, 128], strides = [1, 1]} : vector<16x256xf32> to vector<2x128xf32>
    %180 = arith.truncf %178 : vector<2x32xf32> to vector<2x32xbf16>
    %cst_40 = arith.constant dense<0.000000e+00> : vector<2x128xf32>
    %181 = tpu.matmul %180, %0, %cst_40 {dimension_numbers = #tpu.dot_dimension_numbers<[1], [0], [0], [1], [0, 0, 1, 1], [], []>} : vector<2x32xbf16>, vector<32x128xbf16>, vector<2x128xf32> -> vector<2x128xf32>
    %182 = arith.addf %179, %181 : vector<2x128xf32>
    %183 = arith.negf %182 : vector<2x128xf32>
    %184 = math.exp %183 : vector<2x128xf32>
    %cst_41 = arith.constant 1.000000e+00 : f32
    %185 = vector.broadcast %cst_41 : f32 to vector<2x128xf32>
    %186 = arith.addf %185, %184 : vector<2x128xf32>
    %187 = arith.divf %185, %186 : vector<2x128xf32>
    %188 = vector.extract_strided_slice %187 {offsets = [0, 0], sizes = [2, 32], strides = [1, 1]} : vector<2x128xf32> to vector<2x32xf32>
    %189 = vector.extract_strided_slice %187 {offsets = [0, 32], sizes = [2, 32], strides = [1, 1]} : vector<2x128xf32> to vector<2x32xf32>
    %190 = vector.extract_strided_slice %187 {offsets = [0, 64], sizes = [2, 32], strides = [1, 1]} : vector<2x128xf32> to vector<2x32xf32>
    %cst_42 = arith.constant 2.000000e+00 : f32
    %191 = vector.broadcast %cst_42 : f32 to vector<2x32xf32>
    %192 = arith.mulf %191, %190 : vector<2x32xf32>
    %cst_43 = arith.constant 1.000000e+00 : f32
    %193 = vector.broadcast %cst_43 : f32 to vector<2x32xf32>
    %194 = arith.subf %192, %193 : vector<2x32xf32>
    %195 = vector.extract_strided_slice %187 {offsets = [0, 96], sizes = [2, 32], strides = [1, 1]} : vector<2x128xf32> to vector<2x32xf32>
    %196 = arith.mulf %189, %176 : vector<2x32xf32>
    %197 = arith.mulf %188, %194 : vector<2x32xf32>
    %198 = arith.addf %196, %197 : vector<2x32xf32>
    %199 = math.tanh %198 : vector<2x32xf32>
    %200 = arith.mulf %195, %199 : vector<2x32xf32>
    %201 = arith.truncf %200 : vector<2x32xf32> to vector<2x32xbf16>
    %c0_44 = arith.constant 0 : index
    %c0_45 = arith.constant 0 : index
    %202 = vector.load %arg3[%c0_44, %c0_45] : memref<32x128xbf16, #tpu.memory_space<vmem>>, vector<32x128xbf16>
    %cst_46 = arith.constant dense<0.000000e+00> : vector<2x128xf32>
    %203 = tpu.matmul %201, %202, %cst_46 {dimension_numbers = #tpu.dot_dimension_numbers<[1], [0], [0], [1], [0, 0, 1, 1], [], []>} : vector<2x32xbf16>, vector<32x128xbf16>, vector<2x128xf32> -> vector<2x128xf32>
    %204 = arith.addf %203, %30 : vector<2x128xf32>
    %c0_47 = arith.constant 0 : index
    %c0_48 = arith.constant 0 : index
    %205 = vector.load %arg6[%c0_47, %c0_48] : memref<2x128xf32, #tpu.memory_space<vmem>>, vector<2x128xf32>
    tpu.vector_store %arg6[%c0_47, %c0_48], %204 {strides = array<i32>} : memref<2x128xf32, #tpu.memory_space<vmem>>, vector<2x128xf32>,
    return
  }
}

</mosaic_0001>

<llo_original>
// kernel: lstm_model_forward.1
$region0: #{lstm_model_forward.1}
  #allocation0 [shape = 'u32[]', space=smem, size = 0x4, offset = 0x4, fixed_abs, tag = 'smem constant byte address 0x4 - core index']
  #allocation1 [shape = 'u32[144,128]{1,0:T(1,128)}', space=vmem, size = 0x12000, scoped, tag = 'internal scratch']
  %s0 = inlined_call_operand.vmem [shape: s32[16,1], index: 0, kind: input, shape index: {}]
  %s1 = inlined_call_operand.hbm [shape: f32[50,256], index: 1, kind: input, shape index: {}]
  %s2 = inlined_call_operand.vmem [shape: bf16[32,128], index: 2, kind: input, shape index: {}]
  %s3 = inlined_call_operand.vmem [shape: bf16[32,128], index: 3, kind: input, shape index: {}]
  %s4 = inlined_call_operand.hbm [shape: bf16[32,128], index: 4, kind: input, shape index: {}]
  %s5 = inlined_call_operand.vmem [shape: f32[1,128], index: 5, kind: input, shape index: {}]
  %s6 = inlined_call_operand.hbm [shape: f32[2,128], index: 6, kind: output, shape index: {}]
  %s7 = sld [smem:[#allocation0]]
  $region42: #{lstm_model_forward.1} parent=0
    _
  %s9 = ssub.s32 1, %s7
  %s10 = scalar_select 0, %s9, %s7
  $region1: #{lstm_model_forward.1} parent=0
    #allocation2 [shape = 'u8[57344]{0}', space=vmem, size = 0xe000, scoped, tag = 'input window, operand 1, single buffered']
    #allocation3 [shape = 's32[1]{0}', space=sflag, size = 0x4, scoped, tag = 'scoped memory for lstm_model_forward.1']
    #allocation4 [shape = 's32[1]{0}', space=sflag, size = 0x4, scoped, tag = 'scoped memory for lstm_model_forward.1']
    #allocation5 [shape = 'u8[8192]{0}', space=vmem, size = 0x2000, scoped, tag = 'input window, operand 4, single buffered']
    #allocation6 [shape = 's32[1]{0}', space=sflag, size = 0x4, scoped, tag = 'scoped memory for lstm_model_forward.1']
    #allocation7 [shape = 'u8[1024]{0}', space=vmem, size = 0x400, scoped, tag = 'output window, operand 0, single buffered']
    %11 = vsyncpa [#allocation3], 0
    %12 = vsyncpa [#allocation6], 0
    %13 = vsyncpa [#allocation4], 0
    // Predicated region
    $region2: #{lstm_model_forward.1} parent=1 // pred_check
      _
    $region3: #{lstm_model_forward.1} parent=1 // pred_check_branch
      %15 = sbr.rel (0) target = $region5
    $region4: #{lstm_model_forward.1} parent=1 // pred_region
      _
    $region5: #{lstm_model_forward.1} parent=1 // pred_fallthru
      _
    // Predicated region
    $region6: #{lstm_model_forward.1} parent=1 // pred_check
      _
    $region7: #{lstm_model_forward.1} parent=1 // pred_check_branch
      %17 = sbr.rel (0) target = $region9
    $region8: #{lstm_model_forward.1} parent=1 // pred_region
      %s19 = ssub.s32 1792, 1792
      %20 = vsyncadd [#allocation3], %s19
      %s21 = sshll.u32 [#allocation2], 4
      %s22 = int_to_ptr.vmem [resolvable:$true] %s21
      %27 = dma.hbm_to_vmem [thread:$0]  %s1, 1792, %s22, [#allocation3], 256, 256, 16
    $region9: #{lstm_model_forward.1} parent=1 // pred_fallthru
      _
    // Predicated region
    $region10: #{lstm_model_forward.1} parent=1 // pred_check
      _
    $region11: #{lstm_model_forward.1} parent=1 // pred_check_branch
      %29 = sbr.rel (0) target = $region13
    $region12: #{lstm_model_forward.1} parent=1 // pred_region
      _
    $region13: #{lstm_model_forward.1} parent=1 // pred_fallthru
      _
    // Predicated region
    $region14: #{lstm_model_forward.1} parent=1 // pred_check
      _
    $region15: #{lstm_model_forward.1} parent=1 // pred_check_branch
      %31 = sbr.rel (0) target = $region17
    $region16: #{lstm_model_forward.1} parent=1 // pred_region
      _
    $region17: #{lstm_model_forward.1} parent=1 // pred_fallthru
      _
    // Predicated region
    $region18: #{lstm_model_forward.1} parent=1 // pred_check
      _
    $region19: #{lstm_model_forward.1} parent=1 // pred_check_branch
      %33 = sbr.rel (0) target = $region21
    $region20: #{lstm_model_forward.1} parent=1 // pred_region
      %s35 = ssub.s32 256, 256
      %36 = vsyncadd [#allocation6], %s35
      %s37 = sshll.u32 [#allocation5], 4
      %s38 = int_to_ptr.vmem [resolvable:$true] %s37
      %43 = dma.hbm_to_vmem [thread:$0]  %s4, 256, %s38, [#allocation6], 64, 64, 4
    $region21: #{lstm_model_forward.1} parent=1 // pred_fallthru
      _
    // Predicated region
    $region22: #{lstm_model_forward.1} parent=1 // pred_check
      _
    $region23: #{lstm_model_forward.1} parent=1 // pred_check_branch
      %45 = sbr.rel (0) target = $region25
    $region24: #{lstm_model_forward.1} parent=1 // pred_region
      _
    $region25: #{lstm_model_forward.1} parent=1 // pred_fallthru
      _
    // Predicated region
    $region26: #{lstm_model_forward.1} parent=1 // pred_check
      _
    $region27: #{lstm_model_forward.1} parent=1 // pred_check_branch
      %47 = sbr.rel (0) target = $region29
    $region28: #{lstm_model_forward.1} parent=1 // pred_region
      %48 = dma.done [#allocation3], 1792
    $region29: #{lstm_model_forward.1} parent=1 // pred_fallthru
      _
    // Predicated region
    $region30: #{lstm_model_forward.1} parent=1 // pred_check
      _
    $region31: #{lstm_model_forward.1} parent=1 // pred_check_branch
      %50 = sbr.rel (0) target = $region33
    $region32: #{lstm_model_forward.1} parent=1 // pred_region
      %51 = dma.done [#allocation6], 256
    $region33: #{lstm_model_forward.1} parent=1 // pred_fallthru
      _
    %v53 = vld [vmem:[%s2] sm:$0xf]
    %v54 = vld [vmem:[%s2 + $0x4] sm:$0xf]
    %v55 = vld [vmem:[%s2 + $0x8] sm:$0xf]
    %v56 = vld [vmem:[%s2 + $0xc] sm:$0xf]
    %v57 = vld [vmem:[%s5] sm:$0x1]
    %v58 = vld [vmem:[%s0] sm:$0xff]
    %v59 = vld [vmem:[%s0 + $0x8] sm:$0xff]
    %v60 = vlaneseq
    %v61 = vand.u32 %v60, 127
    %62 = vset.pattern.permute.xlu0 0
    %63 = vperm.xlu0 %62, %v58
    %v64 = vpop.permute.xlu0 %63
    %65 = vset.pattern.permute.xlu0 0
    %66 = vperm.xlu0 %65, %v59
    %v67 = vpop.permute.xlu0 %66
    %vm68 = vcmp.eq.s32.totalorder %v61, %v64
    %vm69 = vcmp.eq.s32.totalorder %v61, %v67
    %v70 = vsel %vm68, 1, 0
    %v71 = vsel %vm69, 1, 0
    %v72 = vcvt.s32.f32 %v70
    %v73 = vcvt.s32.f32 %v71
    %v74 = vld [vmem:[#allocation2] sm:$0xff]
    %v75 = vld [vmem:[#allocation2 + $0x8] sm:$0xff]
    %v76 = vld [vmem:[#allocation2 + $0x10] sm:$0xff]
    %v77 = vld [vmem:[#allocation2 + $0x18] sm:$0xff]
    %v78 = vld [vmem:[#allocation2 + $0x20] sm:$0xff]
    %v79 = vld [vmem:[#allocation2 + $0x28] sm:$0xff]
    %v80 = vld [vmem:[#allocation2 + $0x30] sm:$0xff]
    %v81 = vld [vmem:[#allocation2 + $0x38] sm:$0xff]
    %v82 = vld [vmem:[#allocation2 + $0x40] sm:$0xff]
    %v83 = vld [vmem:[#allocation2 + $0x48] sm:$0xff]
    %v84 = vld [vmem:[#allocation2 + $0x50] sm:$0xff]
    %v85 = vld [vmem:[#allocation2 + $0x58] sm:$0xff]
    %v86 = vld [vmem:[#allocation2 + $0x60] sm:$0x3]
    %v87 = vld [vmem:[#allocation2 + $0x68] sm:$0x3]
    %vm88 = vcmask 408576
    %v90 = vsel %vm88, %v72, 0
    %v93 = vsel %vm88, %v73, 0
    %vm95 = vcmask 1041408
    %v97 = vsel %vm95, %v86, 0
    %v100 = vsel %vm95, %v87, 0
    %102 = vmatprep.subr.mxu0 %v75
    %103 = vmatpush1.msra.mxu0 %v74
    %104 = vmatprep.subr.mxu0 %v77
    %105 = vmatpush1.msra.mxu0 %v76
    %106 = vmatprep.subr.mxu0 %v79
    %107 = vmatpush1.msra.mxu0 %v78
    %108 = vmatprep.subr.mxu0 %v81
    %109 = vmatpush1.msra.mxu0 %v80
    %110 = vmatprep.subr.mxu0 %v83
    %111 = vmatpush1.msra.mxu0 %v82
    %112 = vmatprep.subr.mxu0 %v85
    %113 = vmatpush1.msra.mxu0 %v84
    %114 = vmatprep.subr.mxu0 %v100
    %115 = vmatpush1.msra.mxu0 %v97
    %116 = vmatprep.subr.mxu0 0.0
    %117 = vmatpush1.msra.mxu0 0.0
    %118 = vmatprep.subr.mxu0 0.0
    %119 = vmatpush1.msra.mxu0 0.0
    %120 = vmatprep.subr.mxu0 0.0
    %121 = vmatpush1.msra.mxu0 0.0
    %122 = vmatprep.subr.mxu0 0.0
    %123 = vmatpush1.msra.mxu0 0.0
    %124 = vmatprep.subr.mxu0 0.0
    %125 = vmatpush1.msra.mxu0 0.0
    %126 = vmatprep.subr.mxu0 0.0
    %127 = vmatpush1.msra.mxu0 0.0
    %128 = vmatprep.subr.mxu0 0.0
    %129 = vmatpush1.msra.mxu0 0.0
    %130 = vmatprep.subr.mxu0 0.0
    %131 = vmatpush1.msra.mxu0 0.0
    %132 = vmatprep.subr.mxu0 0.0
    %133 = vmatpush1.msra.mxu0 0.0
    %134 = vmatprep.subr.mxu0 0.0
    %135 = vmatpush1.msra.mxu0 0.0
    %136 = vmatprep.subr.mxu0 0.0
    %137 = vmatpush1.msra.mxu0 0.0
    %138 = vmatprep.subr.mxu0 0.0
    %139 = vmatpush1.msra.mxu0 0.0
    %140 = vmatprep.subr.mxu0 0.0
    %141 = vmatpush1.msra.mxu0 0.0
    %142 = vmatprep.subr.mxu0 0.0
    %143 = vmatpush1.msra.mxu0 0.0
    %144 = vmatprep.subr.mxu0 0.0
    %145 = vmatpush1.msra.mxu0 0.0
    %146 = vmatprep.subr.mxu0 0.0
    %147 = vmatpush1.msra.mxu0 0.0
    %148 = vmatprep.subr.mxu0 0.0
    %149 = vmatpush1.msra.mxu0 0.0
    %150 = vmatprep.subr.mxu0 0.0
    %151 = vmatpush1.msra.mxu0 0.0
    %152 = vmatprep.subr.mxu0 0.0
    %153 = vmatpush1.msra.mxu0 0.0
    %154 = vmatprep.subr.mxu0 0.0
    %155 = vmatpush1.msra.mxu0 0.0
    %156 = vmatprep.subr.mxu0 0.0
    %157 = vmatpush1.msra.mxu0 0.0
    %158 = vmatprep.subr.mxu0 0.0
    %159 = vmatpush1.msra.mxu0 0.0
    %160 = vmatprep.subr.mxu0 0.0
    %161 = vmatpush1.msra.mxu0 0.0
    %162 = vmatprep.subr.mxu0 0.0
    %163 = vmatpush1.msra.mxu0 0.0
    %164 = vmatprep.subr.mxu0 0.0
    %165 = vmatpush1.msra.mxu0 0.0
    %166 = vmatprep.mubr.f32.mxu0 0.0
    %167 = vmatmul.mubr.f32.gmra.mrb[0].mxu0 %v90
    %v168 = vpop.f32.mrb[0].mxu0
    %v169 = vadd.f32 0.0, %v168
    %v170 = vpop.f32.mrb[0].mxu0
    %171 = vmatprep.mubr.f32.mxu0 0.0
    %172 = vmatmul.mubr.f32.gmra.mrb[0].mxu0 %v93
    %v173 = vpop.f32.mrb[0].mxu0
    %v174 = vadd.f32 0.0, %v173
    %v175 = vpop.f32.mrb[0].mxu0
    %v176 = vadd.f32 0.0, %v175
    %177 = vdwg.mxu0
    %v178 = vxor.u32 %v176, 2147483648
    %v179 = vmul.f32 %v178, 1.442695
    %v180 = vpow.pop %v179
    %v181 = vadd.f32 %v180, 1.0
    %v182 = vrcp.pop %v181
    %v183 = vmul.f32 1.0, %v182
    %v184 = vmul.f32 %v183, 2.0
    %v185 = vsub.f32 %v184, 1.0
    %187 = vrot.lane.b32.xlu0 %v185, 64
    %v188 = vpop.permute.xlu0 %187
    %v190 = vmul.f32 %v183, %v188
    %v191 = vtanh.pop %v190
    %193 = vrot.lane.b32.xlu0 %v191, 96
    %v194 = vpop.permute.xlu0 %193
    %v196 = vmul.f32 %v183, %v194
    %v197 = vpack.c.bf16 %v196, %v196
    %v198 = vld [vmem:[#allocation5] sm:$0xf]
    %v199 = vld [vmem:[#allocation5 + $0x4] sm:$0xf]
    %v200 = vld [vmem:[#allocation5 + $0x8] sm:$0xf]
    %v201 = vld [vmem:[#allocation5 + $0xc] sm:$0xf]
    %v203 = vlaneseq
    %v204 = vshrl.u32 %v203, 7
    %v205 = vsub.s32 0, %v204
    %v206 = vrot.slane %v57, %v205
    %v209 = vrot.slane %v197, 3
    %210 = vrot.lane.b32.xlu0 %v209, 32
    %v211 = vpop.permute.xlu0 %210
    %v216 = vunpack.c.l.b16 %v198
    %v217 = vunpack.c.l.b16 %v199
    %v218 = vunpack.c.l.b16 %v200
    %v219 = vunpack.c.l.b16 %v201
    %v220 = vpack.c.b16 %v217, %v216
    %v221 = vpack.c.b16 %v219, %v218
    %vm224 = vcmask 261120
    %v226 = vsel %vm224, %v211, 0
    %228 = vmatprep.subr.bf16.mxu0 0
    %229 = vmatpush1.bf16.msra.mxu0 %v220
    %230 = vmatprep.subr.bf16.mxu0 0
    %231 = vmatpush1.bf16.msra.mxu0 %v221
    %232 = vmatprep.subr.bf16.mxu0 0
    %233 = vmatpush1.bf16.msra.mxu0 0
    %234 = vmatprep.subr.bf16.mxu0 0
    %235 = vmatpush1.bf16.msra.mxu0 0
    %236 = vmatprep.subr.bf16.mxu0 0
    %237 = vmatpush1.bf16.msra.mxu0 0
    %238 = vmatprep.subr.bf16.mxu0 0
    %239 = vmatpush1.bf16.msra.mxu0 0
    %240 = vmatprep.subr.bf16.mxu0 0
    %241 = vmatpush1.bf16.msra.mxu0 0
    %242 = vmatprep.subr.bf16.mxu0 0
    %243 = vmatpush1.bf16.msra.mxu0 0
    %244 = vmatprep.subr.bf16.mxu0 0
    %245 = vmatpush1.bf16.msra.mxu0 0
    %246 = vmatprep.subr.bf16.mxu0 0
    %247 = vmatpush1.bf16.msra.mxu0 0
    %248 = vmatprep.subr.bf16.mxu0 0
    %249 = vmatpush1.bf16.msra.mxu0 0
    %250 = vmatprep.subr.bf16.mxu0 0
    %251 = vmatpush1.bf16.msra.mxu0 0
    %252 = vmatprep.subr.bf16.mxu0 0
    %253 = vmatpush1.bf16.msra.mxu0 0
    %254 = vmatprep.subr.bf16.mxu0 0
    %255 = vmatpush1.bf16.msra.mxu0 0
    %256 = vmatprep.subr.bf16.mxu0 0
    %257 = vmatpush1.bf16.msra.mxu0 0
    %258 = vmatprep.subr.bf16.mxu0 0
    %259 = vmatpush1.bf16.msra.mxu0 0
    %260 = vmatprep.mubr.bf16.mxu0 0
    %261 = vmatmul.mubr.bf16.gmra.mrb[0].mxu0 %v226
    %v262 = vpop.f32.mrb[0].mxu0
    %v263 = vadd.f32 %v206, %v262
    %v264 = vpop.f32.mrb[0].mxu0
    %v265 = vpop.f32.mrb[0].mxu0
    %v266 = vpop.f32.mrb[0].mxu0
    %267 = vdwg.mxu0
    %v268 = vxor.u32 %v169, 2147483648
    %v269 = vmul.f32 %v268, 1.442695
    %v270 = vpow.pop %v269
    %v271 = vadd.f32 %v270, 1.0
    %v272 = vrcp.pop %v271
    %v273 = vmul.f32 1.0, %v272
    %v274 = vmul.f32 %v273, 2.0
    %v275 = vsub.f32 %v274, 1.0
    %277 = vrot.lane.b32.xlu0 %v275, 64
    %v278 = vpop.permute.xlu0 %277
    %v280 = vmul.f32 %v273, %v278
    %v281 = vtanh.pop %v280
    %283 = vrot.lane.b32.xlu0 %v281, 96
    %v284 = vpop.permute.xlu0 %283
    %v286 = vmul.f32 %v273, %v284
    %v287 = vpack.c.bf16 %v286, %v286
    %289 = vrot.lane.b32.xlu0 %v287, 32
    %v290 = vpop.permute.xlu0 %289
    %v295 = vunpack.c.l.b16 %v53
    %v296 = vunpack.c.l.b16 %v54
    %v297 = vunpack.c.l.b16 %v55
    %v298 = vunpack.c.l.b16 %v56
    %v299 = vpack.c.b16 %v296, %v295
    %v300 = vpack.c.b16 %v298, %v297
    %v304 = vsel %vm224, %v290, 0
    %306 = vmatprep.subr.bf16.mxu0 0
    %307 = vmatpush1.bf16.msra.mxu0 %v299
    %308 = vmatprep.subr.bf16.mxu0 0
    %309 = vmatpush1.bf16.msra.mxu0 %v300
    %310 = vmatprep.subr.bf16.mxu0 0
    %311 = vmatpush1.bf16.msra.mxu0 0
    %312 = vmatprep.subr.bf16.mxu0 0
    %313 = vmatpush1.bf16.msra.mxu0 0
    %314 = vmatprep.subr.bf16.mxu0 0
    %315 = vmatpush1.bf16.msra.mxu0 0
    %316 = vmatprep.subr.bf16.mxu0 0
    %317 = vmatpush1.bf16.msra.mxu0 0
    %318 = vmatprep.subr.bf16.mxu0 0
    %319 = vmatpush1.bf16.msra.mxu0 0
    %320 = vmatprep.subr.bf16.mxu0 0
    %321 = vmatpush1.bf16.msra.mxu0 0
    %322 = vmatprep.subr.bf16.mxu0 0
    %323 = vmatpush1.bf16.msra.mxu0 0
    %324 = vmatprep.subr.bf16.mxu0 0
    %325 = vmatpush1.bf16.msra.mxu0 0
    %326 = vmatprep.subr.bf16.mxu0 0
    %327 = vmatpush1.bf16.msra.mxu0 0
    %328 = vmatprep.subr.bf16.mxu0 0
    %329 = vmatpush1.bf16.msra.mxu0 0
    %330 = vmatprep.subr.bf16.mxu0 0
    %331 = vmatpush1.bf16.msra.mxu0 0
    %332 = vmatprep.subr.bf16.mxu0 0
    %333 = vmatpush1.bf16.msra.mxu0 0
    %334 = vmatprep.subr.bf16.mxu0 0
    %335 = vmatpush1.bf16.msra.mxu0 0
    %336 = vmatprep.subr.bf16.mxu0 0
    %337 = vmatpush1.bf16.msra.mxu0 0
    %338 = vmatprep.mubr.bf16.mxu0 0
    %339 = vmatmul.mubr.bf16.gmra.mrb[0].mxu0 %v304
    %v340 = vpop.f32.mrb[0].mxu0
    %v341 = vadd.f32 0.0, %v340
    %v342 = vpop.f32.mrb[0].mxu0
    %v343 = vpop.f32.mrb[0].mxu0
    %v344 = vpop.f32.mrb[0].mxu0
    %345 = vdwg.mxu0
    %v347 = vrot.slane %v341, 6
    %v349 = vadd.f32 %v169, %v347
    %v350 = vxor.u32 %v349, 2147483648
    %v351 = vmul.f32 %v350, 1.442695
    %v352 = vpow.pop %v351
    %v353 = vadd.f32 %v352, 1.0
    %v354 = vrcp.pop %v353
    %v355 = vmul.f32 1.0, %v354
    %v356 = vmul.f32 %v355, 2.0
    %v357 = vsub.f32 %v356, 1.0
    %v359 = vrot.slane %v280, 6
    %360 = vrot.lane.b32.xlu0 %v359, 32
    %v361 = vpop.permute.xlu0 %360
    %v363 = vmul.f32 %v355, %v361
    %365 = vrot.lane.b32.xlu0 %v357, 64
    %v366 = vpop.permute.xlu0 %365
    %v368 = vmul.f32 %v355, %v366
    %370 = vrot.lane.b32.xlu0 %v368, 32
    %v371 = vpop.permute.xlu0 %370
    %v373 = vadd.f32 %v363, %v371
    %v374 = vtanh.pop %v373
    %376 = vrot.lane.b32.xlu0 %v374, 64
    %v377 = vpop.permute.xlu0 %376
    %v379 = vmul.f32 %v355, %v377
    %v380 = vpack.c.bf16 %v379, %v379
    %v382 = vrot.slane %v380, 1
    %383 = vrot.lane.b32.xlu0 %v382, 32
    %v384 = vpop.permute.xlu0 %383
    %v386 = vsel %vm224, %v384, 0
    %388 = vmatprep.subr.bf16.mxu0 0
    %389 = vmatpush1.bf16.msra.mxu0 %v299
    %390 = vmatprep.subr.bf16.mxu0 0
    %391 = vmatpush1.bf16.msra.mxu0 %v300
    %392 = vmatprep.subr.bf16.mxu0 0
    %393 = vmatpush1.bf16.msra.mxu0 0
    %394 = vmatprep.subr.bf16.mxu0 0
    %395 = vmatpush1.bf16.msra.mxu0 0
    %396 = vmatprep.subr.bf16.mxu0 0
    %397 = vmatpush1.bf16.msra.mxu0 0
    %398 = vmatprep.subr.bf16.mxu0 0
    %399 = vmatpush1.bf16.msra.mxu0 0
    %400 = vmatprep.subr.bf16.mxu0 0
    %401 = vmatpush1.bf16.msra.mxu0 0
    %402 = vmatprep.subr.bf16.mxu0 0
    %403 = vmatpush1.bf16.msra.mxu0 0
    %404 = vmatprep.subr.bf16.mxu0 0
    %405 = vmatpush1.bf16.msra.mxu0 0
    %406 = vmatprep.subr.bf16.mxu0 0
    %407 = vmatpush1.bf16.msra.mxu0 0
    %408 = vmatprep.subr.bf16.mxu0 0
    %409 = vmatpush1.bf16.msra.mxu0 0
    %410 = vmatprep.subr.bf16.mxu0 0
    %411 = vmatpush1.bf16.msra.mxu0 0
    %412 = vmatprep.subr.bf16.mxu0 0
    %413 = vmatpush1.bf16.msra.mxu0 0
    %414 = vmatprep.subr.bf16.mxu0 0
    %415 = vmatpush1.bf16.msra.mxu0 0
    %416 = vmatprep.subr.bf16.mxu0 0
    %417 = vmatpush1.bf16.msra.mxu0 0
    %418 = vmatprep.subr.bf16.mxu0 0
    %419 = vmatpush1.bf16.msra.mxu0 0
    %420 = vmatprep.mubr.bf16.mxu0 0
    %421 = vmatmul.mubr.bf16.gmra.mrb[0].mxu0 %v386
    %v422 = vpop.f32.mrb[0].mxu0
    %v423 = vadd.f32 0.0, %v422
    %v424 = vpop.f32.mrb[0].mxu0
    %v425 = vpop.f32.mrb[0].mxu0
    %v426 = vpop.f32.mrb[0].mxu0
    %427 = vdwg.mxu0
    %v429 = vrot.slane %v423, 4
    %v431 = vadd.f32 %v169, %v429
    %v432 = vxor.u32 %v431, 2147483648
    %v433 = vmul.f32 %v432, 1.442695
    %v434 = vpow.pop %v433
    %v435 = vadd.f32 %v434, 1.0
    %v436 = vrcp.pop %v435
    %v437 = vmul.f32 1.0, %v436
    %v438 = vmul.f32 %v437, 2.0
    %v439 = vsub.f32 %v438, 1.0
    %v441 = vrot.slane %v373, 6
    %v443 = vmul.f32 %v437, %v441
    %445 = vrot.lane.b32.xlu0 %v439, 64
    %v446 = vpop.permute.xlu0 %445
    %v448 = vmul.f32 %v437, %v446
    %450 = vrot.lane.b32.xlu0 %v448, 32
    %v451 = vpop.permute.xlu0 %450
    %v453 = vadd.f32 %v443, %v451
    %v454 = vtanh.pop %v453
    %456 = vrot.lane.b32.xlu0 %v454, 64
    %v457 = vpop.permute.xlu0 %456
    %v459 = vmul.f32 %v437, %v457
    %v460 = vpack.c.bf16 %v459, %v459
    %v462 = vrot.slane %v460, 2
    %463 = vrot.lane.b32.xlu0 %v462, 32
    %v464 = vpop.permute.xlu0 %463
    %v466 = vsel %vm224, %v464, 0
    %468 = vmatprep.subr.bf16.mxu0 0
    %469 = vmatpush1.bf16.msra.mxu0 %v299
    %470 = vmatprep.subr.bf16.mxu0 0
    %471 = vmatpush1.bf16.msra.mxu0 %v300
    %472 = vmatprep.subr.bf16.mxu0 0
    %473 = vmatpush1.bf16.msra.mxu0 0
    %474 = vmatprep.subr.bf16.mxu0 0
    %475 = vmatpush1.bf16.msra.mxu0 0
    %476 = vmatprep.subr.bf16.mxu0 0
    %477 = vmatpush1.bf16.msra.mxu0 0
    %478 = vmatprep.subr.bf16.mxu0 0
    %479 = vmatpush1.bf16.msra.mxu0 0
    %480 = vmatprep.subr.bf16.mxu0 0
    %481 = vmatpush1.bf16.msra.mxu0 0
    %482 = vmatprep.subr.bf16.mxu0 0
    %483 = vmatpush1.bf16.msra.mxu0 0
    %484 = vmatprep.subr.bf16.mxu0 0
    %485 = vmatpush1.bf16.msra.mxu0 0
    %486 = vmatprep.subr.bf16.mxu0 0
    %487 = vmatpush1.bf16.msra.mxu0 0
    %488 = vmatprep.subr.bf16.mxu0 0
    %489 = vmatpush1.bf16.msra.mxu0 0
    %490 = vmatprep.subr.bf16.mxu0 0
    %491 = vmatpush1.bf16.msra.mxu0 0
    %492 = vmatprep.subr.bf16.mxu0 0
    %493 = vmatpush1.bf16.msra.mxu0 0
    %494 = vmatprep.subr.bf16.mxu0 0
    %495 = vmatpush1.bf16.msra.mxu0 0
    %496 = vmatprep.subr.bf16.mxu0 0
    %497 = vmatpush1.bf16.msra.mxu0 0
    %498 = vmatprep.subr.bf16.mxu0 0
    %499 = vmatpush1.bf16.msra.mxu0 0
    %500 = vmatprep.mubr.bf16.mxu0 0
    %501 = vmatmul.mubr.bf16.gmra.mrb[0].mxu0 %v466
    %v502 = vpop.f32.mrb[0].mxu0
    %v503 = vadd.f32 0.0, %v502
    %v504 = vpop.f32.mrb[0].mxu0
    %v505 = vpop.f32.mrb[0].mxu0
    %v506 = vpop.f32.mrb[0].mxu0
    %507 = vdwg.mxu0
    %v509 = vrot.slane %v503, 2
    %v511 = vadd.f32 %v169, %v509
    %v512 = vxor.u32 %v511, 2147483648
    %v513 = vmul.f32 %v512, 1.442695
    %v514 = vpow.pop %v513
    %v515 = vadd.f32 %v514, 1.0
    %v516 = vrcp.pop %v515
    %v517 = vmul.f32 1.0, %v516
    %v518 = vmul.f32 %v517, 2.0
    %v519 = vsub.f32 %v518, 1.0
    %v521 = vrot.slane %v453, 6
    %v523 = vmul.f32 %v517, %v521
    %525 = vrot.lane.b32.xlu0 %v519, 64
    %v526 = vpop.permute.xlu0 %525
    %v528 = vmul.f32 %v517, %v526
    %530 = vrot.lane.b32.xlu0 %v528, 32
    %v531 = vpop.permute.xlu0 %530
    %v533 = vadd.f32 %v523, %v531
    %v534 = vtanh.pop %v533
    %536 = vrot.lane.b32.xlu0 %v534, 64
    %v537 = vpop.permute.xlu0 %536
    %v539 = vmul.f32 %v517, %v537
    %v540 = vpack.c.bf16 %v539, %v539
    %v542 = vrot.slane %v540, 3
    %543 = vrot.lane.b32.xlu0 %v542, 32
    %v544 = vpop.permute.xlu0 %543
    %v546 = vsel %vm224, %v544, 0
    %548 = vmatprep.subr.bf16.mxu0 0
    %549 = vmatpush1.bf16.msra.mxu0 %v299
    %550 = vmatprep.subr.bf16.mxu0 0
    %551 = vmatpush1.bf16.msra.mxu0 %v300
    %552 = vmatprep.subr.bf16.mxu0 0
    %553 = vmatpush1.bf16.msra.mxu0 0
    %554 = vmatprep.subr.bf16.mxu0 0
    %555 = vmatpush1.bf16.msra.mxu0 0
    %556 = vmatprep.subr.bf16.mxu0 0
    %557 = vmatpush1.bf16.msra.mxu0 0
    %558 = vmatprep.subr.bf16.mxu0 0
    %559 = vmatpush1.bf16.msra.mxu0 0
    %560 = vmatprep.subr.bf16.mxu0 0
    %561 = vmatpush1.bf16.msra.mxu0 0
    %562 = vmatprep.subr.bf16.mxu0 0
    %563 = vmatpush1.bf16.msra.mxu0 0
    %564 = vmatprep.subr.bf16.mxu0 0
    %565 = vmatpush1.bf16.msra.mxu0 0
    %566 = vmatprep.subr.bf16.mxu0 0
    %567 = vmatpush1.bf16.msra.mxu0 0
    %568 = vmatprep.subr.bf16.mxu0 0
    %569 = vmatpush1.bf16.msra.mxu0 0
    %570 = vmatprep.subr.bf16.mxu0 0
    %571 = vmatpush1.bf16.msra.mxu0 0
    %572 = vmatprep.subr.bf16.mxu0 0
    %573 = vmatpush1.bf16.msra.mxu0 0
    %574 = vmatprep.subr.bf16.mxu0 0
    %575 = vmatpush1.bf16.msra.mxu0 0
    %576 = vmatprep.subr.bf16.mxu0 0
    %577 = vmatpush1.bf16.msra.mxu0 0
    %578 = vmatprep.subr.bf16.mxu0 0
    %579 = vmatpush1.bf16.msra.mxu0 0
    %580 = vmatprep.mubr.bf16.mxu0 0
    %581 = vmatmul.mubr.bf16.gmra.mrb[0].mxu0 %v546
    %v582 = vpop.f32.mrb[0].mxu0
    %v583 = vadd.f32 0.0, %v582
    %v584 = vpop.f32.mrb[0].mxu0
    %v585 = vpop.f32.mrb[0].mxu0
    %v586 = vpop.f32.mrb[0].mxu0
    %587 = vdwg.mxu0
    %v588 = vadd.f32 %v174, %v583
    %v589 = vxor.u32 %v588, 2147483648
    %v590 = vmul.f32 %v589, 1.442695
    %v591 = vpow.pop %v590
    %v592 = vadd.f32 %v591, 1.0
    %v593 = vrcp.pop %v592
    %v594 = vmul.f32 1.0, %v593
    %v595 = vmul.f32 %v594, 2.0
    %v596 = vsub.f32 %v595, 1.0
    %v598 = vrot.slane %v533, 6
    %v600 = vmul.f32 %v594, %v598
    %602 = vrot.lane.b32.xlu0 %v596, 64
    %v603 = vpop.permute.xlu0 %602
    %v605 = vmul.f32 %v594, %v603
    %607 = vrot.lane.b32.xlu0 %v605, 32
    %v608 = vpop.permute.xlu0 %607
    %v610 = vadd.f32 %v600, %v608
    %v611 = vtanh.pop %v610
    %613 = vrot.lane.b32.xlu0 %v611, 64
    %v614 = vpop.permute.xlu0 %613
    %v616 = vmul.f32 %v594, %v614
    %v617 = vpack.c.bf16 %v616, %v616
    %619 = vrot.lane.b32.xlu0 %v617, 32
    %v620 = vpop.permute.xlu0 %619
    %v622 = vsel %vm224, %v620, 0
    %624 = vmatprep.subr.bf16.mxu0 0
    %625 = vmatpush1.bf16.msra.mxu0 %v299
    %626 = vmatprep.subr.bf16.mxu0 0
    %627 = vmatpush1.bf16.msra.mxu0 %v300
    %628 = vmatprep.subr.bf16.mxu0 0
    %629 = vmatpush1.bf16.msra.mxu0 0
    %630 = vmatprep.subr.bf16.mxu0 0
    %631 = vmatpush1.bf16.msra.mxu0 0
    %632 = vmatprep.subr.bf16.mxu0 0
    %633 = vmatpush1.bf16.msra.mxu0 0
    %634 = vmatprep.subr.bf16.mxu0 0
    %635 = vmatpush1.bf16.msra.mxu0 0
    %636 = vmatprep.subr.bf16.mxu0 0
    %637 = vmatpush1.bf16.msra.mxu0 0
    %638 = vmatprep.subr.bf16.mxu0 0
    %639 = vmatpush1.bf16.msra.mxu0 0
    %640 = vmatprep.subr.bf16.mxu0 0
    %641 = vmatpush1.bf16.msra.mxu0 0
    %642 = vmatprep.subr.bf16.mxu0 0
    %643 = vmatpush1.bf16.msra.mxu0 0
    %644 = vmatprep.subr.bf16.mxu0 0
    %645 = vmatpush1.bf16.msra.mxu0 0
    %646 = vmatprep.subr.bf16.mxu0 0
    %647 = vmatpush1.bf16.msra.mxu0 0
    %648 = vmatprep.subr.bf16.mxu0 0
    %649 = vmatpush1.bf16.msra.mxu0 0
    %650 = vmatprep.subr.bf16.mxu0 0
    %651 = vmatpush1.bf16.msra.mxu0 0
    %652 = vmatprep.subr.bf16.mxu0 0
    %653 = vmatpush1.bf16.msra.mxu0 0
    %654 = vmatprep.subr.bf16.mxu0 0
    %655 = vmatpush1.bf16.msra.mxu0 0
    %656 = vmatprep.mubr.bf16.mxu0 0
    %657 = vmatmul.mubr.bf16.gmra.mrb[0].mxu0 %v622
    %v658 = vpop.f32.mrb[0].mxu0
    %v659 = vadd.f32 0.0, %v658
    %v660 = vpop.f32.mrb[0].mxu0
    %v661 = vpop.f32.mrb[0].mxu0
    %v662 = vpop.f32.mrb[0].mxu0
    %663 = vdwg.mxu0
    %v665 = vrot.slane %v659, 6
    %v667 = vadd.f32 %v174, %v665
    %v668 = vxor.u32 %v667, 2147483648
    %v669 = vmul.f32 %v668, 1.442695
    %v670 = vpow.pop %v669
    %v671 = vadd.f32 %v670, 1.0
    %v672 = vrcp.pop %v671
    %v673 = vmul.f32 1.0, %v672
    %v674 = vmul.f32 %v673, 2.0
    %v675 = vsub.f32 %v674, 1.0
    %v677 = vrot.slane %v610, 6
    %v679 = vmul.f32 %v673, %v677
    %681 = vrot.lane.b32.xlu0 %v675, 64
    %v682 = vpop.permute.xlu0 %681
    %v684 = vmul.f32 %v673, %v682
    %686 = vrot.lane.b32.xlu0 %v684, 32
    %v687 = vpop.permute.xlu0 %686
    %v689 = vadd.f32 %v679, %v687
    %v690 = vtanh.pop %v689
    %692 = vrot.lane.b32.xlu0 %v690, 64
    %v693 = vpop.permute.xlu0 %692
    %v695 = vmul.f32 %v673, %v693
    %v696 = vpack.c.bf16 %v695, %v695
    %v698 = vrot.slane %v696, 1
    %699 = vrot.lane.b32.xlu0 %v698, 32
    %v700 = vpop.permute.xlu0 %699
    %v702 = vsel %vm224, %v700, 0
    %704 = vmatprep.subr.bf16.mxu0 0
    %705 = vmatpush1.bf16.msra.mxu0 %v299
    %706 = vmatprep.subr.bf16.mxu0 0
    %707 = vmatpush1.bf16.msra.mxu0 %v300
    %708 = vmatprep.subr.bf16.mxu0 0
    %709 = vmatpush1.bf16.msra.mxu0 0
    %710 = vmatprep.subr.bf16.mxu0 0
    %711 = vmatpush1.bf16.msra.mxu0 0
    %712 = vmatprep.subr.bf16.mxu0 0
    %713 = vmatpush1.bf16.msra.mxu0 0
    %714 = vmatprep.subr.bf16.mxu0 0
    %715 = vmatpush1.bf16.msra.mxu0 0
    %716 = vmatprep.subr.bf16.mxu0 0
    %717 = vmatpush1.bf16.msra.mxu0 0
    %718 = vmatprep.subr.bf16.mxu0 0
    %719 = vmatpush1.bf16.msra.mxu0 0
    %720 = vmatprep.subr.bf16.mxu0 0
    %721 = vmatpush1.bf16.msra.mxu0 0
    %722 = vmatprep.subr.bf16.mxu0 0
    %723 = vmatpush1.bf16.msra.mxu0 0
    %724 = vmatprep.subr.bf16.mxu0 0
    %725 = vmatpush1.bf16.msra.mxu0 0
    %726 = vmatprep.subr.bf16.mxu0 0
    %727 = vmatpush1.bf16.msra.mxu0 0
    %728 = vmatprep.subr.bf16.mxu0 0
    %729 = vmatpush1.bf16.msra.mxu0 0
    %730 = vmatprep.subr.bf16.mxu0 0
    %731 = vmatpush1.bf16.msra.mxu0 0
    %732 = vmatprep.subr.bf16.mxu0 0
    %733 = vmatpush1.bf16.msra.mxu0 0
    %734 = vmatprep.subr.bf16.mxu0 0
    %735 = vmatpush1.bf16.msra.mxu0 0
    %736 = vmatprep.mubr.bf16.mxu0 0
    %737 = vmatmul.mubr.bf16.gmra.mrb[0].mxu0 %v702
    %v738 = vpop.f32.mrb[0].mxu0
    %v739 = vadd.f32 0.0, %v738
    %v740 = vpop.f32.mrb[0].mxu0
    %v741 = vpop.f32.mrb[0].mxu0
    %v742 = vpop.f32.mrb[0].mxu0
    %743 = vdwg.mxu0
    %v745 = vrot.slane %v739, 4
    %v747 = vadd.f32 %v174, %v745
    %v748 = vxor.u32 %v747, 2147483648
    %v749 = vmul.f32 %v748, 1.442695
    %v750 = vpow.pop %v749
    %v751 = vadd.f32 %v750, 1.0
    %v752 = vrcp.pop %v751
    %v753 = vmul.f32 1.0, %v752
    %v754 = vmul.f32 %v753, 2.0
    %v755 = vsub.f32 %v754, 1.0
    %v757 = vrot.slane %v689, 6
    %v759 = vmul.f32 %v753, %v757
    %761 = vrot.lane.b32.xlu0 %v755, 64
    %v762 = vpop.permute.xlu0 %761
    %v764 = vmul.f32 %v753, %v762
    %766 = vrot.lane.b32.xlu0 %v764, 32
    %v767 = vpop.permute.xlu0 %766
    %v769 = vadd.f32 %v759, %v767
    %v770 = vtanh.pop %v769
    %772 = vrot.lane.b32.xlu0 %v770, 64
    %v773 = vpop.permute.xlu0 %772
    %v775 = vmul.f32 %v753, %v773
    %v776 = vpack.c.bf16 %v775, %v775
    %v778 = vrot.slane %v776, 2
    %779 = vrot.lane.b32.xlu0 %v778, 32
    %v780 = vpop.permute.xlu0 %779
    %v782 = vsel %vm224, %v780, 0
    %784 = vmatprep.subr.bf16.mxu0 0
    %785 = vmatpush1.bf16.msra.mxu0 %v299
    %786 = vmatprep.subr.bf16.mxu0 0
    %787 = vmatpush1.bf16.msra.mxu0 %v300
    %788 = vmatprep.subr.bf16.mxu0 0
    %789 = vmatpush1.bf16.msra.mxu0 0
    %790 = vmatprep.subr.bf16.mxu0 0
    %791 = vmatpush1.bf16.msra.mxu0 0
    %792 = vmatprep.subr.bf16.mxu0 0
    %793 = vmatpush1.bf16.msra.mxu0 0
    %794 = vmatprep.subr.bf16.mxu0 0
    %795 = vmatpush1.bf16.msra.mxu0 0
    %796 = vmatprep.subr.bf16.mxu0 0
    %797 = vmatpush1.bf16.msra.mxu0 0
    %798 = vmatprep.subr.bf16.mxu0 0
    %799 = vmatpush1.bf16.msra.mxu0 0
    %800 = vmatprep.subr.bf16.mxu0 0
    %801 = vmatpush1.bf16.msra.mxu0 0
    %802 = vmatprep.subr.bf16.mxu0 0
    %803 = vmatpush1.bf16.msra.mxu0 0
    %804 = vmatprep.subr.bf16.mxu0 0
    %805 = vmatpush1.bf16.msra.mxu0 0
    %806 = vmatprep.subr.bf16.mxu0 0
    %807 = vmatpush1.bf16.msra.mxu0 0
    %808 = vmatprep.subr.bf16.mxu0 0
    %809 = vmatpush1.bf16.msra.mxu0 0
    %810 = vmatprep.subr.bf16.mxu0 0
    %811 = vmatpush1.bf16.msra.mxu0 0
    %812 = vmatprep.subr.bf16.mxu0 0
    %813 = vmatpush1.bf16.msra.mxu0 0
    %814 = vmatprep.subr.bf16.mxu0 0
    %815 = vmatpush1.bf16.msra.mxu0 0
    %816 = vmatprep.mubr.bf16.mxu0 0
    %817 = vmatmul.mubr.bf16.gmra.mrb[0].mxu0 %v782
    %v818 = vpop.f32.mrb[0].mxu0
    %v819 = vadd.f32 0.0, %v818
    %v820 = vpop.f32.mrb[0].mxu0
    %v821 = vpop.f32.mrb[0].mxu0
    %v822 = vpop.f32.mrb[0].mxu0
    %823 = vdwg.mxu0
    %v825 = vrot.slane %v819, 2
    %v827 = vadd.f32 %v174, %v825
    %v828 = vxor.u32 %v827, 2147483648
    %v829 = vmul.f32 %v828, 1.442695
    %v830 = vpow.pop %v829
    %v831 = vadd.f32 %v830, 1.0
    %v832 = vrcp.pop %v831
    %v833 = vmul.f32 1.0, %v832
    %v834 = vmul.f32 %v833, 2.0
    %v835 = vsub.f32 %v834, 1.0
    %v837 = vrot.slane %v769, 6
    %v839 = vmul.f32 %v833, %v837
    %841 = vrot.lane.b32.xlu0 %v835, 64
    %v842 = vpop.permute.xlu0 %841
    %v844 = vmul.f32 %v833, %v842
    %846 = vrot.lane.b32.xlu0 %v844, 32
    %v847 = vpop.permute.xlu0 %846
    %v849 = vadd.f32 %v839, %v847
    %v850 = vtanh.pop %v849
    %852 = vrot.lane.b32.xlu0 %v850, 64
    %v853 = vpop.permute.xlu0 %852
    %v855 = vmul.f32 %v833, %v853
    %v856 = vpack.c.bf16 %v855, %v855
    %v857 = vld [vmem:[%s3] sm:$0xf]
    %v858 = vld [vmem:[%s3 + $0x4] sm:$0xf]
    %v859 = vld [vmem:[%s3 + $0x8] sm:$0xf]
    %v860 = vld [vmem:[%s3 + $0xc] sm:$0xf]
    %v862 = vrot.slane %v856, 3
    %863 = vrot.lane.b32.xlu0 %v862, 32
    %v864 = vpop.permute.xlu0 %863
    %v869 = vunpack.c.l.b16 %v857
    %v870 = vunpack.c.l.b16 %v858
    %v871 = vunpack.c.l.b16 %v859
    %v872 = vunpack.c.l.b16 %v860
    %v873 = vpack.c.b16 %v870, %v869
    %v874 = vpack.c.b16 %v872, %v871
    %v878 = vsel %vm224, %v864, 0
    %880 = vmatprep.subr.bf16.mxu0 0
    %881 = vmatpush1.bf16.msra.mxu0 %v873
    %882 = vmatprep.subr.bf16.mxu0 0
    %883 = vmatpush1.bf16.msra.mxu0 %v874
    %884 = vmatprep.subr.bf16.mxu0 0
    %885 = vmatpush1.bf16.msra.mxu0 0
    %886 = vmatprep.subr.bf16.mxu0 0
    %887 = vmatpush1.bf16.msra.mxu0 0
    %888 = vmatprep.subr.bf16.mxu0 0
    %889 = vmatpush1.bf16.msra.mxu0 0
    %890 = vmatprep.subr.bf16.mxu0 0
    %891 = vmatpush1.bf16.msra.mxu0 0
    %892 = vmatprep.subr.bf16.mxu0 0
    %893 = vmatpush1.bf16.msra.mxu0 0
    %894 = vmatprep.subr.bf16.mxu0 0
    %895 = vmatpush1.bf16.msra.mxu0 0
    %896 = vmatprep.subr.bf16.mxu0 0
    %897 = vmatpush1.bf16.msra.mxu0 0
    %898 = vmatprep.subr.bf16.mxu0 0
    %899 = vmatpush1.bf16.msra.mxu0 0
    %900 = vmatprep.subr.bf16.mxu0 0
    %901 = vmatpush1.bf16.msra.mxu0 0
    %902 = vmatprep.subr.bf16.mxu0 0
    %903 = vmatpush1.bf16.msra.mxu0 0
    %904 = vmatprep.subr.bf16.mxu0 0
    %905 = vmatpush1.bf16.msra.mxu0 0
    %906 = vmatprep.subr.bf16.mxu0 0
    %907 = vmatpush1.bf16.msra.mxu0 0
    %908 = vmatprep.subr.bf16.mxu0 0
    %909 = vmatpush1.bf16.msra.mxu0 0
    %910 = vmatprep.subr.bf16.mxu0 0
    %911 = vmatpush1.bf16.msra.mxu0 0
    %912 = vmatprep.mubr.bf16.mxu0 0
    %913 = vmatmul.mubr.bf16.gmra.mrb[0].mxu0 %v878
    %v914 = vpop.f32.mrb[0].mxu0
    %v915 = vadd.f32 %v263, %v914
    %v916 = vpop.f32.mrb[0].mxu0
    %v917 = vpop.f32.mrb[0].mxu0
    %v918 = vpop.f32.mrb[0].mxu0
    %919 = vdwg.mxu0
    %920 = vst [vmem:[#allocation7] sm:$0x3] %v915
    // Predicated region
    $region34: #{lstm_model_forward.1} parent=1 // pred_check
      _
    $region35: #{lstm_model_forward.1} parent=1 // pred_check_branch
      %922 = sbr.rel (0) target = $region37
    $region36: #{lstm_model_forward.1} parent=1 // pred_region
      %s924 = ssub.s32 32, 32
      %925 = vsyncadd [#allocation4], %s924
      %s927 = sshll.u32 [#allocation7], 4
      %s928 = int_to_ptr.vmem [resolvable:$true] %s927
      %930 = dma.vmem_to_hbm [thread:$0]  %s928, 32, %s6, [#allocation4]
    $region37: #{lstm_model_forward.1} parent=1 // pred_fallthru
      _
    // Predicated region
    $region38: #{lstm_model_forward.1} parent=1 // pred_check
      _
    $region39: #{lstm_model_forward.1} parent=1 // pred_check_branch
      %932 = sbr.rel (0) target = $region41
    $region40: #{lstm_model_forward.1} parent=1 // pred_region
      %933 = dma.done [#allocation4], 32
    $region41: #{lstm_model_forward.1} parent=1 // pred_fallthru
      _
    %934 = vsyncpa [#allocation3], 1
    %935 = vsyncpa [#allocation6], 1
    %936 = vsyncpa [#allocation4], 1

</llo_original>
